<compile_context>
chip_gen: v6e
topology: v6e:2x2x1
jax: 0.10.0
libtpu: 0.0.40
codegen_flags: <defaults>
</compile_context>

<pallas_src>
import jax
import jax.numpy as jnp
from jax.experimental import pallas as pl
from jax.experimental.pallas import tpu as pltpu


def _logz_kernel(logz_ref, o_ref):
    # Single scalar copy on the scalar path (sld/sst); no vector slots touched.
    o_ref[0, 0] = logz_ref[0, 0]


@jax.jit
def logz_forward(logz_param: jax.Array) -> jax.Array:
    """Forward pass of LogZ: returns the scalar parameter.

    Args:
      logz_param: (1, 1) float32 array holding the logZ parameter (stored in
        this layout once at init so no per-call reshape/convert is needed).

    Returns:
      0-d float32 array equal to logz_param, matching the PyTorch module's
      forward output.
    """
    out = pl.pallas_call(
        _logz_kernel,
        out_shape=jax.ShapeDtypeStruct((1, 1), jnp.float32),
        in_specs=[pl.BlockSpec(memory_space=pltpu.SMEM)],
        out_specs=pl.BlockSpec(memory_space=pltpu.SMEM),
        input_output_aliases={0: 0},
        cost_estimate=pl.CostEstimate(flops=0, transcendentals=0, bytes_accessed=8),
    )(logz_param)
    # Squeeze back to a 0-d scalar inside the same jit so XLA folds it.
    return out.reshape(())


if __name__ == "__main__":
    # Deterministic init, matching nn.Parameter(torch.tensor(0.0)).
    # (PRNGKey(0) created per instructions; the spec fixes the value to 0.0.)
    _ = jax.random.PRNGKey(0)
    logz_param = jnp.zeros((1, 1), dtype=jnp.float32)  # parameter in kernel layout

    result = logz_forward(logz_param)
    result = jax.block_until_ready(result)

    # Semantic check against the reference forward (which just returns logZ).
    assert result.shape == ()
    assert result.dtype == jnp.float32
    assert float(result) == 0.0

    print("KERNEL_OK")
</pallas_src>

<mosaic_0001>
module attributes {stable_mosaic.version = 11 : i64} {
  func.func @_logz_kernel(%arg0: memref<1x1xf32, #tpu.memory_space<smem>>, %arg1: memref<1x1xf32, #tpu.memory_space<smem>>) attributes {dimension_semantics = [], scalar_prefetch = 0 : i64, scratch_operands = 0 : i64, tpu.core_type = #tpu.core_type<tc>} {
    %c0 = arith.constant 0 : index
    %c0_0 = arith.constant 0 : index
    %0 = memref.load %arg0[%c0, %c0_0] : memref<1x1xf32, #tpu.memory_space<smem>>
    %c0_1 = arith.constant 0 : index
    %c0_2 = arith.constant 0 : index
    %1 = memref.load %arg1[%c0_1, %c0_2] : memref<1x1xf32, #tpu.memory_space<smem>>
    memref.store %0, %arg1[%c0_1, %c0_2] : memref<1x1xf32, #tpu.memory_space<smem>>
    return
  }
}

</mosaic_0001>

<llo_original>
// kernel: logz_forward.1
$region0: #{logz_forward.1}
  #allocation0 [shape = 'u32[]', space=smem, size = 0x4, offset = 0x4, fixed_abs, tag = 'smem constant byte address 0x4 - core index']
  #allocation1 [shape = 'u32[144,128]{1,0:T(1,128)}', space=vmem, size = 0x12000, scoped, tag = 'internal scratch']
  #allocation2 [shape = 'f32[1,1]{1,0:T(1,128)S(6)}', space=smem, size = 0x200, scoped, tag = 'scoped memory for logz_forward.1']
  %s0 = inlined_call_operand.<no memory space> [shape: f32[1,1], index: 0, kind: input, shape index: {}, may-alias: {0,1}]
  %s1 = inlined_call_operand.hbm [shape: f32[1,1], index: 1, kind: output, shape index: {}, may-alias: {0,1}]
  %s2 = sld [smem:[#allocation0]]
  $region14: #{logz_forward.1} parent=0
    _
  %s4 = ssub.s32 1, %s2
  %s5 = scalar_select 0, %s4, %s2
  %6 = sst [smem:[#allocation2]] %s0
  $region1: #{logz_forward.1} parent=0
    #allocation3 [shape = 'u8[512]{0}', space=smem, size = 0x200, scoped, tag = 'output window, operand 0, single buffered']
    #allocation4 [shape = 's32[1]{0}', space=sflag, size = 0x4, scoped, tag = 'scoped memory for logz_forward.1']
    %7 = vsyncpa [#allocation4], 0
    // Predicated region
    $region2: #{logz_forward.1} parent=1 // pred_check
      _
    $region3: #{logz_forward.1} parent=1 // pred_check_branch
      %9 = sbr.rel (0) target = $region5
    $region4: #{logz_forward.1} parent=1 // pred_region
      _
    $region5: #{logz_forward.1} parent=1 // pred_fallthru
      _
    %s10 = sld [smem:[#allocation2]]
    %s11 = scalar_lea.smem [#allocation3], 0
    %12 = sst [smem:[%s11]] %s10
    // Predicated region
    $region6: #{logz_forward.1} parent=1 // pred_check
      _
    $region7: #{logz_forward.1} parent=1 // pred_check_branch
      %14 = sbr.rel (0) target = $region9
    $region8: #{logz_forward.1} parent=1 // pred_region
      %s16 = ssub.s32 16, 16
      %17 = vsyncadd [#allocation4], %s16
      %20 = dma.smem_to_hbm [#allocation3], 16, %s1, [#allocation4]
    $region9: #{logz_forward.1} parent=1 // pred_fallthru
      _
    // Predicated region
    $region10: #{logz_forward.1} parent=1 // pred_check
      _
    $region11: #{logz_forward.1} parent=1 // pred_check_branch
      %22 = sbr.rel (0) target = $region13
    $region12: #{logz_forward.1} parent=1 // pred_region
      %23 = dma.done [#allocation4], 16
    $region13: #{logz_forward.1} parent=1 // pred_fallthru
      _
    %24 = sfence
    %25 = vsyncpa [#allocation4], 1

</llo_original>
